<compile_context>
chip_gen: v5e
topology: v5e:2x2
jax: 0.10.0
libtpu: 0.0.40
codegen_flags: <defaults>
</compile_context>

<pallas_src>
import functools

import jax
import jax.numpy as jnp
from jax.experimental import pallas as pl
from jax.experimental.pallas import tpu as pltpu

# Newer JAX exposes pltpu.CompilerParams; older releases call it TPUCompilerParams.
_CompilerParams = getattr(pltpu, "CompilerParams", None) or getattr(pltpu, "TPUCompilerParams")


# ---------------------------------------------------------------------------
# Pallas kernel: one M-tile of (patches @ W) + (pos_embed + bias)
# ---------------------------------------------------------------------------
def _vit_input_kernel(patch_ref, w_ref, pos_ref, out_ref):
    # patch_ref: (block_rows, D_in)          flattened patches for this row tile
    # w_ref:     (D_in, E)                   embedding weight (pre-transposed), grid-invariant
    # pos_ref:   (N, E) or (block_rows, E)   pos_embed + bias, grid-invariant
    # out_ref:   (block_rows, E)
    emb = jnp.dot(patch_ref[...], w_ref[...],
                  preferred_element_type=jnp.float32)          # MXU, f32 accumulate
    rows, e = out_ref.shape
    n = pos_ref.shape[0]
    if n == rows:
        out = emb + pos_ref[...]                               # plain f32 VPU add
    else:
        # block_rows = bpb * N with N % 8 == 0: the split is a no-op tile re-index.
        bpb = rows // n
        out = (emb.reshape(bpb, n, e) + pos_ref[...][None]).reshape(rows, e)
    out_ref[...] = out.astype(out_ref.dtype)


# ---------------------------------------------------------------------------
# Plain-JAX glue: nn.Unfold(kernel=P, stride=P) + permute(0, 2, 1)
# ---------------------------------------------------------------------------
def image_to_patches(x, patch_size):
    """x: [B, C, H, W] (NCHW) -> [B, num_patches, C*P*P] with (c, kh, kw) order."""
    B, C, H, W = x.shape
    P = patch_size
    x = x.reshape(B, C, H // P, P, W // P, P)        # [B, C, Hp, P, Wp, P]
    x = x.transpose(0, 2, 4, 1, 3, 5)                # [B, Hp, Wp, C, P, P]
    return x.reshape(B, (H // P) * (W // P), C * P * P)


def make_position_embed(num_patches, embed_size):
    # Matches the PyTorch module (even embed_size only, like the original).
    position = jnp.arange(num_patches, dtype=jnp.float32)[:, None]
    div_term = jnp.exp(jnp.arange(0, embed_size, 2, dtype=jnp.float32)
                       * (-jnp.log(10000.0) / embed_size))
    pos = jnp.zeros((num_patches, embed_size), dtype=jnp.float32)
    pos = pos.at[:, 0::2].set(jnp.sin(position * div_term))
    pos = pos.at[:, 1::2].set(jnp.cos(position * div_term))
    return pos


# ---------------------------------------------------------------------------
# Wrapper
# ---------------------------------------------------------------------------
def vit_input_forward(x, patch_size, weight, bias, pos_embed,
                      compute_dtype=jnp.bfloat16, out_dtype=jnp.float32,
                      target_block_rows=None):
    """x: [B, C, H, W]; weight: [D_in, E] (pre-transposed vs nn.Linear); bias: [E];
    pos_embed: [N, E].  Returns [B, N, E] in out_dtype (default float32).

    compute_dtype controls the matmul *operand* dtype only (accumulation is f32);
    use jnp.float32 to match the PyTorch module's numerics exactly."""
    B, C, H, W = x.shape
    P = patch_size
    N = (H // P) * (W // P)
    D_in, E = weight.shape
    M = B * N

    # ---- generation-aware VMEM budget & default block size --------------------
    vmem_cap = 64 << 20                               # conservative (v7x) default
    try:
        info = pltpu.get_tpu_info()
        vmem_cap = int(getattr(info, "vmem_capacity_bytes", vmem_cap))
    except Exception:
        pass
    big_vmem = vmem_cap >= (100 << 20)                # v5e/v6e: 128 MiB; v7x: 64 MiB
    if target_block_rows is None:
        target_block_rows = 1536 if big_vmem else 768

    # ---- patchify (cast first so any materialized intermediate is narrow) -----
    # TODO(synk): verify in HLO that allow_input_fusion fuses the 6-D transpose; if
    # it does not, the remaining win is moving the (C,P,P) reorder into the kernel
    # via a raw NCHW image BlockSpec.
    xc = x.astype(compute_dtype)
    wc = weight.astype(compute_dtype)
    patches = image_to_patches(xc, P).reshape(M, D_in)

    pos_bias = (pos_embed + bias[None, :]).astype(jnp.float32)   # fold bias once

    # ---- row-block sizing: multiple of N, sublane-aligned, grid >= min(B, 4) ---
    req = 16 if jnp.dtype(compute_dtype).itemsize == 2 else 8
    desired_grid = min(B, 4)
    max_bpb = max(1, min(B // desired_grid, max(1, target_block_rows // N)))
    candidates = [d for d in range(1, B + 1) if B % d == 0 and (d * N) % req == 0]
    if candidates:
        under = [d for d in candidates if d <= max_bpb]
        bpb = max(under) if under else min(candidates)
        block_rows = bpb * N
    else:
        bpb, block_rows = B, M        # full-extent block (exempt from the 8-row rule)
    grid_m = M // block_rows

    # pos+bias at its natural (N, E) shape when the in-kernel broadcast is a cheap
    # sublane-aligned reshape; otherwise pre-tile it to one block (grid-invariant).
    if N % 8 == 0:
        pos_arg, pos_block = pos_bias, (N, E)
    else:
        pos_arg = jnp.tile(pos_bias, (block_rows // N, 1))
        pos_block = (block_rows, E)

    in_bytes = jnp.dtype(compute_dtype).itemsize
    out_bytes = jnp.dtype(out_dtype).itemsize
    cost = pl.CostEstimate(
        flops=2 * M * D_in * E,
        transcendentals=0,
        bytes_accessed=(M * D_in * in_bytes            # patch stream
                        + D_in * E * in_bytes          # weight (read once, resident)
                        + pos_block[0] * E * 4         # pos+bias (read once, resident)
                        + M * E * out_bytes))          # output stream
    # Streamed tiles double-buffered; grid-invariant operands counted x2 as well
    # (conservative) until single-buffering via pipeline_mode is applied.
    # TODO(synk): pipeline_mode=pl.Buffered(1) on the weight / pos specs once stable.
    vmem_est = 2 * (block_rows * D_in * in_bytes
                    + D_in * E * in_bytes
                    + pos_block[0] * E * 4
                    + block_rows * E * out_bytes)
    vmem_limit = int(min(max(2 * vmem_est, 16 << 20),
                         max(32 << 20, vmem_cap - (24 << 20))))

    out = pl.pallas_call(
        _vit_input_kernel,
        out_shape=jax.ShapeDtypeStruct((M, E), out_dtype),
        grid=(grid_m,),
        in_specs=[
            pl.BlockSpec((block_rows, D_in), lambda i: (i, 0)),
            pl.BlockSpec((D_in, E), lambda i: (0, 0)),
            pl.BlockSpec(pos_block, lambda i: (0, 0)),
        ],
        out_specs=pl.BlockSpec((block_rows, E), lambda i: (i, 0)),
        compiler_params=_CompilerParams(
            dimension_semantics=("parallel",),
            allow_input_fusion=[True, False, False],   # let XLA pull patchify into input 0's DMA
            vmem_limit_bytes=vmem_limit,
        ),
        cost_estimate=cost,
    )(patches, wc, pos_arg)

    return out.reshape(B, N, E)


# ---------------------------------------------------------------------------
if __name__ == "__main__":
    # Small shapes consistent with the module.
    image_size = 16
    patch_size = 4
    in_channels = 4
    embed_size = 32
    batch = 2

    num_patches = (image_size // patch_size) ** 2          # 16
    patch_dim = patch_size * patch_size * in_channels      # 64

    key = jax.random.PRNGKey(0)
    kx, kw, kb = jax.random.split(key, 3)

    # NCHW input, like the PyTorch module.
    x = jax.random.normal(kx, (batch, in_channels, image_size, image_size),
                          dtype=jnp.float32)

    # nn.Linear(patch_dim, embed_size) params, stored pre-transposed as [D_in, E].
    bound = 1.0 / (patch_dim ** 0.5)
    weight = jax.random.uniform(kw, (patch_dim, embed_size),
                                minval=-bound, maxval=bound, dtype=jnp.float32)
    bias = jax.random.uniform(kb, (embed_size,),
                              minval=-bound, maxval=bound, dtype=jnp.float32)
    pos_embed = make_position_embed(num_patches, embed_size)

    run_exact = jax.jit(functools.partial(vit_input_forward, patch_size=patch_size,
                                          compute_dtype=jnp.float32))
    run_fast = jax.jit(functools.partial(vit_input_forward, patch_size=patch_size))  # bf16 operands

    # Reference in plain JAX (module semantics).
    ref = image_to_patches(x, patch_size) @ weight + bias + pos_embed[None]

    # Exact-semantics (f32) path.
    out = jax.block_until_ready(run_exact(x, weight=weight, bias=bias, pos_embed=pos_embed))
    assert out.shape == (batch, num_patches, embed_size)
    assert jnp.allclose(out, ref, atol=1e-4, rtol=1e-4)

    # Default bandwidth-optimized bf16-operand path (f32 accumulation), looser tolerance.
    out_fast = jax.block_until_ready(run_fast(x, weight=weight, bias=bias, pos_embed=pos_embed))
    assert out_fast.shape == (batch, num_patches, embed_size)
    assert jnp.allclose(out_fast, ref, atol=1e-1, rtol=1e-1)

    print("KERNEL_OK")
</pallas_src>

<mosaic_0001>
module attributes {stable_mosaic.version = 11 : i64} {
  func.func @_vit_input_kernel(%arg0: i32, %arg1: memref<16x64xf32, #tpu.memory_space<vmem>>, %arg2: memref<64x32xf32, #tpu.memory_space<vmem>>, %arg3: memref<16x32xf32, #tpu.memory_space<vmem>>, %arg4: memref<16x32xf32, #tpu.memory_space<vmem>>) attributes {dimension_semantics = [#tpu.dimension_semantics<parallel>], iteration_bounds = array<i64: 2>, scalar_prefetch = 0 : i64, scratch_operands = 0 : i64, tpu.core_type = #tpu.core_type<tc>, window_params = [{transform_indices = @transform_0, window_bounds = array<i64: 16, 64>}, {pipeline_mode = #tpu.pipeline_mode<synchronous>, transform_indices = @transform_1, window_bounds = array<i64: 64, 32>}, {pipeline_mode = #tpu.pipeline_mode<synchronous>, transform_indices = @transform_2, window_bounds = array<i64: 16, 32>}, {transform_indices = @transform_3, window_bounds = array<i64: 16, 32>}]} {
    %c0 = arith.constant 0 : index
    %c0_0 = arith.constant 0 : index
    %0 = vector.load %arg1[%c0, %c0_0] : memref<16x64xf32, #tpu.memory_space<vmem>>, vector<16x64xf32>
    %c0_1 = arith.constant 0 : index
    %c0_2 = arith.constant 0 : index
    %1 = vector.load %arg2[%c0_1, %c0_2] : memref<64x32xf32, #tpu.memory_space<vmem>>, vector<64x32xf32>
    %cst = arith.constant dense<0.000000e+00> : vector<16x32xf32>
    %2 = tpu.matmul %0, %1, %cst {dimension_numbers = #tpu.dot_dimension_numbers<[1], [0], [0], [1], [0, 0, 1, 1], [], []>} : vector<16x64xf32>, vector<64x32xf32>, vector<16x32xf32> -> vector<16x32xf32>
    %c0_3 = arith.constant 0 : index
    %c0_4 = arith.constant 0 : index
    %3 = vector.load %arg3[%c0_3, %c0_4] : memref<16x32xf32, #tpu.memory_space<vmem>>, vector<16x32xf32>
    %4 = arith.addf %2, %3 : vector<16x32xf32>
    %c0_5 = arith.constant 0 : index
    %c0_6 = arith.constant 0 : index
    %5 = vector.load %arg4[%c0_5, %c0_6] : memref<16x32xf32, #tpu.memory_space<vmem>>, vector<16x32xf32>
    tpu.vector_store %arg4[%c0_5, %c0_6], %4 {strides = array<i32>} : memref<16x32xf32, #tpu.memory_space<vmem>>, vector<16x32xf32>,
    return
  }
  func.func @transform_0(%arg0: i32) -> (i32, i32) {
    %c0_i32 = arith.constant 0 : i32
    %c0_i32_0 = arith.constant 0 : i32
    return %arg0, %c0_i32 : i32, i32
  }
  func.func @transform_1(%arg0: i32) -> (i32, i32) {
    %c0_i32 = arith.constant 0 : i32
    %c0_i32_0 = arith.constant 0 : i32
    %c0_i32_1 = arith.constant 0 : i32
    return %c0_i32, %c0_i32_0 : i32, i32
  }
  func.func @transform_2(%arg0: i32) -> (i32, i32) {
    %c0_i32 = arith.constant 0 : i32
    %c0_i32_0 = arith.constant 0 : i32
    %c0_i32_1 = arith.constant 0 : i32
    return %c0_i32, %c0_i32_0 : i32, i32
  }
  func.func @transform_3(%arg0: i32) -> (i32, i32) {
    %c0_i32 = arith.constant 0 : i32
    %c0_i32_0 = arith.constant 0 : i32
    return %arg0, %c0_i32 : i32, i32
  }
}

</mosaic_0001>

<llo_original>
// kernel: vit_input_forward.1
$region0: #{vit_input_forward.1}
  #allocation0 [shape = 'u32[]', space=smem, size = 0x4, offset = 0x4, fixed_abs, tag = 'smem constant byte address 0x4 - core index']
  #allocation1 [shape = 'u32[72,128]{1,0:T(1,128)}', space=vmem, size = 0x9000, scoped, tag = 'internal scratch']
  %s0 = inlined_call_operand.vmem [shape: f32[32,64], index: 0, kind: input, shape index: {}]
  %s1 = inlined_call_operand.vmem [shape: f32[64,32], index: 1, kind: input, shape index: {}]
  %s2 = inlined_call_operand.vmem [shape: f32[16,32], index: 2, kind: input, shape index: {}]
  %s3 = inlined_call_operand.hbm [shape: f32[32,32], index: 3, kind: output, shape index: {}]
  %s4 = sld [smem:[#allocation0]]
  $region45: #{vit_input_forward.1} parent=0
    _
  %s6 = ssub.s32 1, %s4
  %s7 = scalar_select 0, %s6, %s4
  $region1: #{vit_input_forward.1} parent=0
    #allocation2 [shape = 'u8[16384]{0}', space=vmem, size = 0x4000, scoped, tag = 'output window, operand 0']
    #allocation3 [shape = 's32[2]{0}', space=sflag, size = 0x8, scoped, tag = 'scoped memory for vit_input_forward.1']
    %8 = vsyncpa [#allocation3], 0
    %s9 = scalar_lea.sflag [#allocation3], 1
    %10 = vsyncpa %s9, 0
    loop: start=0, step=1, limit=4
    $region2: #{vit_input_forward.1} parent=1 // loop_pre_header
      _
    $region3: #{vit_input_forward.1} parent=1 // loop_header
      %s12 = sphi 0, %s16
      %p13 = scmp.ge.s32.totalorder %s12, 4
      %s22 = sphi 0, %s24
      %s25 = sphi 0, %s22
      %s26 = sphi 0, %s25
      %s42 = sphi 0, %s26
      %s46 = sphi 0, %s46
      %s48 = sphi 0, %s46
      %s49 = sphi 0, %s48
      %s63 = sphi 0, %s49
      %s67 = sphi 0, %s67
      %s69 = sphi 0, %s67
      %s70 = sphi 0, %s69
      %s84 = sphi 0, %s70
      %s90 = sphi 0, %s92
      %s93 = sphi 0, %s90
      %s94 = sphi 0, %s93
      %s110 = sphi 0, %s94
    $region4: #{vit_input_forward.1} parent=1 // loop_header_branch
      %15 = sbr.rel (%p13) target = $region8
    $region5: #{vit_input_forward.1} parent=1 // loop_body
      %s17 = ssub.s32 %s12, 1
      %s18 = ssub.s32 %s12, 2
      %s19 = sadd.s32 %s12, 1
      %s20 = ssub.s32 %s12, %s19
      %p21 = scmp.eq.s32.totalorder %s20, 0
      %s23 = sadd.s32 %s22, 1
      %s24 = scalar_select %p21, %s22, %s23
      %p27 = pneg %p21
      %p28 = scmp.eq.s32.totalorder %s12, 1
      %p29 = por %p27, %p28
      %p30 = scmp.ne.s32.totalorder %s22, %s25
      %p31 = scmp.eq.s32.totalorder %s12, 0
      %p32 = por %p30, %p31
      %p33 = scmp.ne.s32.totalorder %s22, %s25
      %p34 = scmp.eq.s32.totalorder %s17, 1
      %p35 = por %p33, %p34
      %p36 = scmp.ne.s32.totalorder %s25, %s26
      %p37 = scmp.eq.s32.totalorder %s17, 0
      %p38 = por %p36, %p37
      %p39 = scmp.ne.s32.totalorder %s25, %s26
      %p40 = scmp.eq.s32.totalorder %s18, 1
      %p41 = por %p39, %p40
      %p43 = scmp.ne.s32.totalorder %s26, %s42
      %p44 = scmp.eq.s32.totalorder %s18, 0
      %p45 = por %p43, %p44
      %s47 = sadd.s32 %s46, 1
      %p50 = scmp.eq.s32.totalorder %s12, 1
      %p51 = scmp.ne.s32.totalorder %s46, %s48
      %p52 = scmp.eq.s32.totalorder %s12, 0
      %p53 = por %p51, %p52
      %p54 = scmp.ne.s32.totalorder %s46, %s48
      %p55 = scmp.eq.s32.totalorder %s17, 1
      %p56 = por %p54, %p55
      %p57 = scmp.ne.s32.totalorder %s48, %s49
      %p58 = scmp.eq.s32.totalorder %s17, 0
      %p59 = por %p57, %p58
      %p60 = scmp.ne.s32.totalorder %s48, %s49
      %p61 = scmp.eq.s32.totalorder %s18, 1
      %p62 = por %p60, %p61
      %p64 = scmp.ne.s32.totalorder %s49, %s63
      %p65 = scmp.eq.s32.totalorder %s18, 0
      %p66 = por %p64, %p65
      %s68 = sadd.s32 %s67, 1
      %p71 = scmp.eq.s32.totalorder %s12, 1
      %p72 = scmp.ne.s32.totalorder %s67, %s69
      %p73 = scmp.eq.s32.totalorder %s12, 0
      %p74 = por %p72, %p73
      %p75 = scmp.ne.s32.totalorder %s67, %s69
      %p76 = scmp.eq.s32.totalorder %s17, 1
      %p77 = por %p75, %p76
      %p78 = scmp.ne.s32.totalorder %s69, %s70
      %p79 = scmp.eq.s32.totalorder %s17, 0
      %p80 = por %p78, %p79
      %p81 = scmp.ne.s32.totalorder %s69, %s70
      %p82 = scmp.eq.s32.totalorder %s18, 1
      %p83 = por %p81, %p82
      %p85 = scmp.ne.s32.totalorder %s70, %s84
      %p86 = scmp.eq.s32.totalorder %s18, 0
      %p87 = por %p85, %p86
      %s88 = ssub.s32 %s12, %s19
      %p89 = scmp.eq.s32.totalorder %s88, 0
      %s91 = sadd.s32 %s90, 1
      %s92 = scalar_select %p89, %s90, %s91
      %p95 = pneg %p89
      %p96 = scmp.eq.s32.totalorder %s12, 1
      %p97 = por %p95, %p96
      %p98 = scmp.ne.s32.totalorder %s90, %s93
      %p99 = scmp.eq.s32.totalorder %s12, 0
      %p100 = por %p98, %p99
      %p101 = scmp.ne.s32.totalorder %s90, %s93
      %p102 = scmp.eq.s32.totalorder %s17, 1
      %p103 = por %p101, %p102
      %p104 = scmp.ne.s32.totalorder %s93, %s94
      %p105 = scmp.eq.s32.totalorder %s17, 0
      %p106 = por %p104, %p105
      %p107 = scmp.ne.s32.totalorder %s93, %s94
      %p108 = scmp.eq.s32.totalorder %s18, 1
      %p109 = por %p107, %p108
      %p111 = scmp.ne.s32.totalorder %s94, %s110
      %p112 = scmp.eq.s32.totalorder %s18, 0
      %p113 = por %p111, %p112
      %p114 = scmp.le.s32.totalorder 1, %s12
      %p115 = scmp.lt.s32.totalorder %s12, 3
      %p116 = pnand %p114, %p115
      %p117 = pneg %p116
      // Predicated region
      $region9: #{vit_input_forward.1} parent=5 // pred_check
        _
      $region10: #{vit_input_forward.1} parent=5 // pred_check_branch
        %119 = sbr.rel (%p116) target = $region12
      $region11: #{vit_input_forward.1} parent=5 // pred_region
        %s120 = ssub.s32 %s12, 1
        // Predicated region
        $region13: #{vit_input_forward.1} parent=11 // pred_check
          %p121 = pneg %p59
        $region14: #{vit_input_forward.1} parent=11 // pred_check_branch
          %123 = sbr.rel (%p121) target = $region16
        $region15: #{vit_input_forward.1} parent=11 // pred_region
          _
        $region16: #{vit_input_forward.1} parent=11 // pred_fallthru
          _
        // Predicated region
        $region17: #{vit_input_forward.1} parent=11 // pred_check
          %p124 = pneg %p80
        $region18: #{vit_input_forward.1} parent=11 // pred_check_branch
          %126 = sbr.rel (%p124) target = $region20
        $region19: #{vit_input_forward.1} parent=11 // pred_region
          _
        $region20: #{vit_input_forward.1} parent=11 // pred_fallthru
          _
      $region12: #{vit_input_forward.1} parent=5 // pred_fallthru
        _
      %p127 = scmp.lt.s32.totalorder %s12, 2
      // Predicated region
      $region21: #{vit_input_forward.1} parent=5 // pred_check
        %p128 = pneg %p127
      $region22: #{vit_input_forward.1} parent=5 // pred_check_branch
        %130 = sbr.rel (%p128) target = $region24
      $region23: #{vit_input_forward.1} parent=5 // pred_region
        // Predicated region
        $region25: #{vit_input_forward.1} parent=23 // pred_check
          %p131 = pneg %p32
        $region26: #{vit_input_forward.1} parent=23 // pred_check_branch
          %133 = sbr.rel (%p131) target = $region28
        $region27: #{vit_input_forward.1} parent=23 // pred_region
          %s134 = smul.u32 2, %s12
          %p135 = scmp.lt.s32.totalorder %s134, 3
          %s136 = scalar_select %p135, %s134, 3
          %s137 = smul.addr %s136, 8
          %s138 = scalar_lea.vmem %s0, %s137
          %s139 = smul.u32 2, %s12
        $region28: #{vit_input_forward.1} parent=23 // pred_fallthru
          _
      $region24: #{vit_input_forward.1} parent=5 // pred_fallthru
        _
      %p140 = scmp.le.s32.totalorder 1, %s12
      %p141 = scmp.lt.s32.totalorder %s12, 3
      %p142 = pnand %p140, %p141
      %p143 = pneg %p142
      // Predicated region
      $region29: #{vit_input_forward.1} parent=5 // pred_check
        _
      $region30: #{vit_input_forward.1} parent=5 // pred_check_branch
        %145 = sbr.rel (%p142) target = $region32
      $region31: #{vit_input_forward.1} parent=5 // pred_region
        %s146 = ssub.s32 %s12, 1
        %s147 = smul.u32 2, %s17
        %p148 = scmp.lt.s32.totalorder %s147, 3
        %s149 = scalar_select %p148, %s147, 3
        %s150 = smul.addr %s149, 8
        %s151 = scalar_lea.vmem %s0, %s150
        %p152 = pneg %p38
        %p153 = pneg %p35
        %p154 = pneg %p59
        %p155 = pneg %p56
        %p156 = pneg %p80
        %p157 = pneg %p77
        %p158 = pneg %p106
        %p159 = pneg %p103
        %s160 = sand.u32 %s93, 1
        %s161 = scalar_lea.sflag [#allocation3], %s160
        %s162 = sand.u32 %s93, 1
        %s163 = smul.addr %s162, 16
        %s164 = scalar_lea.vmem [#allocation2], %s163
        %s165 = smul.u32 2, %s17
        %p166 = scmp.lt.s32.totalorder %s165, 3
        %s167 = scalar_select %p166, %s165, 3
        %s168 = smul.addr %s167, 8
        %s169 = scalar_lea.vmem %s0, %s168
        %s170 = smul.u32 2, %s17
        %s171 = smul.u32 2, %s17
        %v172 = vld [vmem:[%s169] sm:$0xff]
        %v173 = vld [vmem:[%s169 + $0x8] sm:$0xff]
        %v174 = vld [vmem:[%s1] sm:$0xff]
        %v175 = vld [vmem:[%s1 + $0x8] sm:$0xff]
        %v176 = vld [vmem:[%s1 + $0x10] sm:$0xff]
        %v177 = vld [vmem:[%s1 + $0x18] sm:$0xff]
        %v178 = vld [vmem:[%s1 + $0x20] sm:$0xff]
        %v179 = vld [vmem:[%s1 + $0x28] sm:$0xff]
        %v180 = vld [vmem:[%s1 + $0x30] sm:$0xff]
        %v181 = vld [vmem:[%s1 + $0x38] sm:$0xff]
        %v182 = vld [vmem:[%s2] sm:$0xff]
        %v183 = vld [vmem:[%s2 + $0x8] sm:$0xff]
        %vm184 = vcmask 523264
        %v186 = vsel %vm184, %v172, 0
        %v189 = vsel %vm184, %v173, 0
        %191 = vmatpush.msra.mxu0 0.0
        %192 = vmatpush.msra.mxu0 0.0
        %193 = vmatpush.msra.mxu0 0.0
        %194 = vmatpush.msra.mxu0 0.0
        %195 = vmatpush.msra.mxu0 0.0
        %196 = vmatpush.msra.mxu0 0.0
        %197 = vmatpush.msra.mxu0 0.0
        %198 = vmatpush.msra.mxu0 0.0
        %199 = vmatpush.msra.mxu0 %v181
        %200 = vmatpush.msra.mxu0 %v180
        %201 = vmatpush.msra.mxu0 %v179
        %202 = vmatpush.msra.mxu0 %v178
        %203 = vmatpush.msra.mxu0 %v177
        %204 = vmatpush.msra.mxu0 %v176
        %205 = vmatpush.msra.mxu0 %v175
        %206 = vmatpush.msra.mxu0 %v174
        %207 = vmatmul.f32.gmra.mxu0 %v186
        %v208 = vpop.f32.mrf.mxu0
        %v209 = vadd.f32 %v182, %v208
        %210 = vmatmul.f32.gmra.mxu0 %v189
        %v211 = vpop.f32.mrf.mxu0
        %v212 = vadd.f32 %v183, %v211
        %213 = vdwg.mxu0
        %vm214 = vcmask 261120
        %215 = vst.msk [vmem:[%s164] sm:$0xff] %vm214, %v209
        %216 = vst.msk [vmem:[%s164 + $0x8] sm:$0xff] %vm214, %v212
        %s217 = sand.u32 %s93, 1
        %s218 = scalar_lea.sflag [#allocation3], %s217
        %s219 = sand.u32 %s93, 1
        %s220 = smul.addr %s219, 16
        %s221 = scalar_lea.vmem [#allocation2], %s220
        // Predicated region
        $region33: #{vit_input_forward.1} parent=31 // pred_check
          %p222 = pneg %p103
        $region34: #{vit_input_forward.1} parent=31 // pred_check_branch
          %224 = sbr.rel (%p222) target = $region36
        $region35: #{vit_input_forward.1} parent=31 // pred_region
          %s225 = smul.u32 2, %s17
          %227 = vsyncadd %s218, 0
          %s228 = smul.addr %s225, 8
          %s229 = scalar_lea.hbm %s3, %s228
          %s230 = sshll.u32 %s221, 4
          %s231 = int_to_ptr.vmem [resolvable:$true] %s230
          %s232 = sshll.u32 %s229, 4
          %s233 = int_to_ptr.hbm [resolvable:$true] %s232
          %238 = dma.vmem_to_hbm [thread:$0]  %s231, 256, %s233, %s218, 128, 128, 8
        $region36: #{vit_input_forward.1} parent=31 // pred_fallthru
          _
      $region32: #{vit_input_forward.1} parent=5 // pred_fallthru
        _
      %p239 = scmp.le.s32.totalorder 2, %s12
      // Predicated region
      $region37: #{vit_input_forward.1} parent=5 // pred_check
        %p240 = pneg %p239
      $region38: #{vit_input_forward.1} parent=5 // pred_check_branch
        %242 = sbr.rel (%p240) target = $region40
      $region39: #{vit_input_forward.1} parent=5 // pred_region
        %s243 = ssub.s32 %s12, 2
        // Predicated region
        $region41: #{vit_input_forward.1} parent=39 // pred_check
          %p244 = pneg %p109
        $region42: #{vit_input_forward.1} parent=39 // pred_check_branch
          %246 = sbr.rel (%p244) target = $region44
        $region43: #{vit_input_forward.1} parent=39 // pred_region
          %s247 = sand.u32 %s94, 1
          %s248 = scalar_lea.sflag [#allocation3], %s247
          %s249 = sand.u32 %s94, 1
          %s250 = smul.addr %s249, 16
          %s251 = scalar_lea.vmem [#allocation2], %s250
          %253 = dma.done %s248, 256
        $region44: #{vit_input_forward.1} parent=39 // pred_fallthru
          _
      $region40: #{vit_input_forward.1} parent=5 // pred_fallthru
        _
    $region6: #{vit_input_forward.1} parent=1 // loop_footer
      %s16 = sadd.s32 1, %s12
    $region7: #{vit_input_forward.1} parent=1 // loop_footer_branch
      %11 = sbr.rel target = $region3
    $region8: #{vit_input_forward.1} parent=1 // loop_exit
      _
    %254 = vsyncpa [#allocation3], 1
    %s255 = scalar_lea.sflag [#allocation3], 1
    %256 = vsyncpa %s255, 1

</llo_original>
